<compile_context>
chip_gen: v6e
topology: v6e:2x2x1
jax: 0.10.0
libtpu: 0.0.40
codegen_flags: <defaults>
</compile_context>

<pallas_src>
import functools

import jax
import jax.numpy as jnp
from jax.experimental import pallas as pl
from jax.experimental.pallas import tpu as pltpu

_SUBLANE = 8
_MIB = 1024 * 1024


def _round_up(x, m):
    return ((x + m - 1) // m) * m


def _chip_info():
    """Return (tensorcores_per_device, physical_vmem_bytes_per_core)."""
    kind = ""
    try:
        kind = str(jax.devices()[0].device_kind).lower()
    except Exception:
        pass
    is_v7 = ("7x" in kind) or ("v7" in kind) or ("tpu7" in kind)

    vmem = None
    try:
        info = pltpu.get_tpu_info()
        v = getattr(info, "vmem_capacity_bytes", None)
        if v:
            vmem = int(v)
    except Exception:
        pass

    if is_v7:
        return 2, min(vmem or 64 * _MIB, 64 * _MIB)
    return 1, (vmem or 128 * _MIB)


def _mrl_plus_kernel(pos_ref, neg_ref, out_ref, acc_ref, *, gamma,
                     total_batch, tile_b, tiles_per_split):
    c = pl.program_id(0)              # batch split (a TensorCore on v7x)
    i = pl.program_id(1)              # tile index inside this split

    @pl.when(i == 0)
    def _():
        acc_ref[...] = jnp.zeros_like(acc_ref)

    neg = neg_ref[...].astype(jnp.float32)                # (tile_b, N)
    pos = pos_ref[...].astype(jnp.float32)                # (tile_b, 1)

    # Stable softmax pieces; weight_value == gamma - pos + sum(neg*e)/sum(e).
    m = jnp.max(neg, axis=-1, keepdims=True)
    e = jnp.exp(neg - m)                                  # EUP
    num = jnp.sum(neg * e, axis=-1, keepdims=True)        # (tile_b, 1)
    den = jnp.sum(e, axis=-1, keepdims=True)              # (tile_b, 1)

    # EUP approx reciprocal + one Newton step (den >= 1 -> ~f32 accurate).
    r = pl.reciprocal(den, approx=True)
    r = r * (2.0 - den * r)

    relu_wv = jnp.maximum(gamma - pos + num * r, 0.0)     # (tile_b, 1)

    # Rows past the true batch only exist in the last ragged tile and in
    # clamped re-read steps; keep the mask off the interior-tile hot path.
    row0 = (c * tiles_per_split + i) * tile_b
    interior = row0 + tile_b <= total_batch

    @pl.when(interior)
    def _():
        acc_ref[...] += relu_wv

    @pl.when(jnp.logical_not(interior))
    def _():
        local = jax.lax.broadcasted_iota(jnp.int32, (tile_b, 1), 0)
        in_range = (row0 + local) < total_batch
        acc_ref[...] += jnp.where(in_range, relu_wv, 0.0)

    # Single cross-sublane/lane reduce per split, in the epilogue only.
    @pl.when(i == pl.num_programs(1) - 1)
    def _():
        out_ref[...] = jnp.sum(acc_ref[...]).reshape(1, 1, 1)


def mrl_plus_loss(positive_samples_score, negative_samples_score, gamma, *,
                  subsampling_weight=None, tile_b=None, num_splits=None):
    """Pallas implementation of MRL_plus.forward (subsampling_weight=None).

    positive_samples_score: (B, 1) float (f32 or bf16 — do NOT pre-cast)
    negative_samples_score: (B, N) float (f32 or bf16 — do NOT pre-cast)
    returns: scalar float32 loss
    """
    # TODO(synk): subsampling_weight path (weighted mean) not implemented.
    assert subsampling_weight is None

    B, N = negative_samples_score.shape
    assert positive_samples_score.shape == (B, 1)
    gamma = float(gamma)

    cores, phys_vmem = _chip_info()
    if phys_vmem <= 64 * _MIB:               # v7x-class: 64 MiB per core
        vmem_limit = 40 * _MIB
        budget = 28 * _MIB
    else:                                    # v5e / v6e: 128 MiB per core
        vmem_limit = 80 * _MIB
        budget = 56 * _MIB
    vmem_limit = min(vmem_limit, phys_vmem - 16 * _MIB)

    if num_splits is None:
        num_splits = cores
    num_splits = max(1, int(num_splits))

    # VMEM bytes per batch row: double-buffered neg block in its own dtype,
    # ~3 full-tile f32 temporaries (upcast, exp, neg*e), plus the lane-padded
    # (tile_b, 1) pos double buffer and column accumulator (512 B each).
    neg_isz = negative_samples_score.dtype.itemsize
    bytes_per_row = 2 * N * neg_isz + 3 * N * 4 + 3 * 512

    if tile_b is None:
        tile_b = budget // bytes_per_row
    tile_b = max(_SUBLANE, (int(tile_b) // _SUBLANE) * _SUBLANE)
    tile_b = min(tile_b, _round_up(B, _SUBLANE))

    # Rectangular grid with no leftover clamped tiles: round the tile count up
    # to a multiple of num_splits, then shrink tile_b to cover B tightly.
    tiles_total = pl.cdiv(B, tile_b)
    num_splits = max(1, min(num_splits, tiles_total))
    tiles_per_split = pl.cdiv(tiles_total, num_splits)
    tiles_total = tiles_per_split * num_splits
    tile_b = _round_up(pl.cdiv(B, tiles_total), _SUBLANE)
    n_blocks = pl.cdiv(B, tile_b)            # blocks actually present in HBM

    kernel = functools.partial(
        _mrl_plus_kernel, gamma=gamma, total_batch=B,
        tile_b=tile_b, tiles_per_split=tiles_per_split)

    def block_map(c, i):
        # Clamp so any (rare) fully-masked extra step re-reads a valid block
        # instead of indexing past the array; such rows are masked in-kernel.
        return (jnp.minimum(c * tiles_per_split + i, n_blocks - 1), 0)

    if num_splits > 1 and num_splits == cores:
        # Only core_parallel reliably shards a grid axis across TensorCores
        # (v7x); each core then owns its own acc scratch and output partial.
        split_sem = getattr(pltpu, "CORE_PARALLEL", "parallel")
    elif num_splits > 1:
        split_sem = "parallel"
    else:
        split_sem = "arbitrary"

    partials = pl.pallas_call(
        kernel,
        out_shape=jax.ShapeDtypeStruct((num_splits, 1, 1), jnp.float32),
        grid_spec=pltpu.PrefetchScalarGridSpec(
            num_scalar_prefetch=0,
            grid=(num_splits, tiles_per_split),
            in_specs=[
                pl.BlockSpec((tile_b, 1), block_map),   # streamed pos
                pl.BlockSpec((tile_b, N), block_map),   # streamed neg
            ],
            out_specs=pl.BlockSpec((1, 1, 1), lambda c, i: (c, 0, 0)),
            scratch_shapes=[pltpu.VMEM((tile_b, 1), jnp.float32)],
        ),
        compiler_params=pltpu.CompilerParams(
            dimension_semantics=(split_sem, "arbitrary"),
            vmem_limit_bytes=int(vmem_limit),
        ),
    )(positive_samples_score, negative_samples_score)

    # Mean over the true batch; outer relu(loss).mean() is relu of the scalar.
    total = jnp.sum(partials)
    return jnp.maximum(total / jnp.float32(B), 0.0)


def mrl_plus_reference(pos, neg, gamma):
    """Pure-JAX reference matching the PyTorch forward exactly."""
    weight = jax.nn.softmax(neg, axis=-1)
    value = gamma - pos + neg
    weight_value = jnp.sum(value * weight, axis=-1)
    loss = jnp.mean(jax.nn.relu(weight_value))
    return jnp.mean(jax.nn.relu(loss))


if __name__ == "__main__":
    key = jax.random.PRNGKey(0)
    k1, k2, k3, k4 = jax.random.split(key, 4)

    gamma = 12.0   # module __init__ parameter, set deterministically

    # 1) Small aligned case, default (auto) tiling.
    B, N = 16, 128
    pos = jax.random.normal(k1, (B, 1), dtype=jnp.float32)
    neg = jax.random.normal(k2, (B, N), dtype=jnp.float32)
    loss = jax.block_until_ready(mrl_plus_loss(pos, neg, gamma))
    ref = mrl_plus_reference(pos, neg, gamma)
    assert jnp.allclose(loss, ref, rtol=1e-5, atol=1e-5), (loss, ref)

    # 2) Ragged batch, multiple tiles, explicit 2-way split (exercises the
    #    boundary masking, clamped index map and per-split partial sums).
    B2, N2 = 300, 256
    pos2 = jax.random.normal(k3, (B2, 1), dtype=jnp.float32)
    neg2 = jax.random.normal(k4, (B2, N2), dtype=jnp.float32)
    loss2 = jax.block_until_ready(
        mrl_plus_loss(pos2, neg2, gamma, tile_b=64, num_splits=2))
    ref2 = mrl_plus_reference(pos2, neg2, gamma)
    assert jnp.allclose(loss2, ref2, rtol=1e-5, atol=1e-5), (loss2, ref2)

    # 3) bf16 inputs (HBM-bound kernel: callers should pass bf16; the kernel
    #    upcasts to f32 internally so results match the f32 math exactly).
    pos3 = pos2.astype(jnp.bfloat16)
    neg3 = neg2.astype(jnp.bfloat16)
    loss3 = jax.block_until_ready(mrl_plus_loss(pos3, neg3, gamma))
    ref3 = mrl_plus_reference(pos3.astype(jnp.float32),
                              neg3.astype(jnp.float32), gamma)
    assert jnp.allclose(loss3, ref3, rtol=1e-5, atol=1e-5), (loss3, ref3)

    print("KERNEL_OK")
</pallas_src>

<mosaic_0001>
module attributes {stable_mosaic.version = 11 : i64} {
  func.func @_mrl_plus_kernel(%arg0: i32, %arg1: i32, %arg2: memref<16x1xf32, #tpu.memory_space<vmem>>, %arg3: memref<16x128xf32, #tpu.memory_space<vmem>>, %arg4: memref<1x1x1xf32, #tpu.memory_space<vmem>>, %arg5: memref<16x1xf32, #tpu.memory_space<vmem>>) attributes {dimension_semantics = [#tpu.dimension_semantics<arbitrary>, #tpu.dimension_semantics<arbitrary>], iteration_bounds = array<i64: 1, 1>, scalar_prefetch = 0 : i64, scratch_operands = 1 : i64, tpu.core_type = #tpu.core_type<tc>, window_params = [{transform_indices = @transform_0, window_bounds = array<i64: 16, 1>}, {transform_indices = @transform_1, window_bounds = array<i64: 16, 128>}, {transform_indices = @transform_2, window_bounds = array<i64: 1, 1, 1>}]} {
    %c0_i32 = arith.constant 0 : i32
    %0 = arith.cmpi eq, %arg1, %c0_i32 : i32
    %1 = arith.extui %0 : i1 to i32
    %c0_i32_0 = arith.constant 0 : i32
    %2 = arith.cmpi ne, %1, %c0_i32_0 : i32
    scf.if %2 {
      %cst_15 = arith.constant 0.000000e+00 : f32
      %39 = vector.broadcast %cst_15 : f32 to vector<16x1xf32>
      %c0_16 = arith.constant 0 : index
      %c0_17 = arith.constant 0 : index
      %40 = vector.load %arg5[%c0_16, %c0_17] : memref<16x1xf32, #tpu.memory_space<vmem>>, vector<16x1xf32>
      tpu.vector_store %arg5[%c0_16, %c0_17], %39 {strides = array<i32>} : memref<16x1xf32, #tpu.memory_space<vmem>>, vector<16x1xf32>,
    } else {
    }
    %c0 = arith.constant 0 : index
    %c0_1 = arith.constant 0 : index
    %3 = vector.load %arg3[%c0, %c0_1] : memref<16x128xf32, #tpu.memory_space<vmem>>, vector<16x128xf32>
    %c0_2 = arith.constant 0 : index
    %c0_3 = arith.constant 0 : index
    %4 = vector.load %arg2[%c0_2, %c0_3] : memref<16x1xf32, #tpu.memory_space<vmem>>, vector<16x1xf32>
    %cst = arith.constant dense<0xFF800000> : vector<16xf32>
    %5 = vector.multi_reduction <maximumf>, %3, %cst [1] : vector<16x128xf32> to vector<16xf32>
    %6 = vector.shape_cast %5 : vector<16xf32> to vector<16x1xf32>
    %7 = vector.broadcast %6 : vector<16x1xf32> to vector<16x128xf32>
    %8 = arith.subf %3, %7 : vector<16x128xf32>
    %9 = math.exp %8 : vector<16x128xf32>
    %10 = arith.mulf %3, %9 : vector<16x128xf32>
    %cst_4 = arith.constant dense<0.000000e+00> : vector<16xf32>
    %11 = vector.multi_reduction <add>, %10, %cst_4 [1] : vector<16x128xf32> to vector<16xf32>
    %12 = vector.shape_cast %11 : vector<16xf32> to vector<16x1xf32>
    %cst_5 = arith.constant dense<0.000000e+00> : vector<16xf32>
    %13 = vector.multi_reduction <add>, %9, %cst_5 [1] : vector<16x128xf32> to vector<16xf32>
    %14 = vector.shape_cast %13 : vector<16xf32> to vector<16x1xf32>
    %15 = tpu.reciprocal %14 {approx = true} : vector<16x1xf32> -> vector<16x1xf32>
    %16 = arith.mulf %14, %15 : vector<16x1xf32>
    %cst_6 = arith.constant 2.000000e+00 : f32
    %17 = vector.broadcast %cst_6 : f32 to vector<16x1xf32>
    %18 = arith.subf %17, %16 : vector<16x1xf32>
    %19 = arith.mulf %15, %18 : vector<16x1xf32>
    %cst_7 = arith.constant 1.200000e+01 : f32
    %20 = vector.broadcast %cst_7 : f32 to vector<16x1xf32>
    %21 = arith.subf %20, %4 : vector<16x1xf32>
    %22 = arith.mulf %12, %19 : vector<16x1xf32>
    %23 = arith.addf %21, %22 : vector<16x1xf32>
    %cst_8 = arith.constant 0.000000e+00 : f32
    %24 = vector.broadcast %cst_8 : f32 to vector<16x1xf32>
    %25 = arith.maximumf %23, %24 : vector<16x1xf32>
    %c1_i32 = arith.constant 1 : i32
    %26 = arith.muli %arg0, %c1_i32 : i32
    %27 = arith.addi %26, %arg1 : i32
    %c16_i32 = arith.constant 16 : i32
    %28 = arith.muli %27, %c16_i32 : i32
    %c16_i32_9 = arith.constant 16 : i32
    %29 = arith.addi %28, %c16_i32_9 : i32
    %c16_i32_10 = arith.constant 16 : i32
    %30 = arith.cmpi sle, %29, %c16_i32_10 : i32
    %31 = arith.extui %30 : i1 to i32
    %c0_i32_11 = arith.constant 0 : i32
    %32 = arith.cmpi ne, %31, %c0_i32_11 : i32
    scf.if %32 {
      %c0_15 = arith.constant 0 : index
      %c0_16 = arith.constant 0 : index
      %39 = vector.load %arg5[%c0_15, %c0_16] : memref<16x1xf32, #tpu.memory_space<vmem>>, vector<16x1xf32>
      %40 = arith.addf %39, %25 : vector<16x1xf32>
      %c0_17 = arith.constant 0 : index
      %c0_18 = arith.constant 0 : index
      %41 = vector.load %arg5[%c0_17, %c0_18] : memref<16x1xf32, #tpu.memory_space<vmem>>, vector<16x1xf32>
      tpu.vector_store %arg5[%c0_17, %c0_18], %40 {strides = array<i32>} : memref<16x1xf32, #tpu.memory_space<vmem>>, vector<16x1xf32>,
    } else {
    }
    %true = arith.constant true
    %33 = arith.xori %30, %true : i1
    %34 = arith.extui %33 : i1 to i32
    %c0_i32_12 = arith.constant 0 : i32
    %35 = arith.cmpi ne, %34, %c0_i32_12 : i32
    scf.if %35 {
      %39 = tpu.iota {dimensions = array<i32: 0>} : vector<16x1xi32>
      %40 = vector.broadcast %28 : i32 to vector<16x1xi32>
      %41 = arith.addi %40, %39 : vector<16x1xi32>
      %c16_i32_15 = arith.constant 16 : i32
      %42 = vector.broadcast %c16_i32_15 : i32 to vector<16x1xi32>
      %43 = arith.cmpi slt, %41, %42 : vector<16x1xi32>
      %c0_16 = arith.constant 0 : index
      %c0_17 = arith.constant 0 : index
      %44 = vector.load %arg5[%c0_16, %c0_17] : memref<16x1xf32, #tpu.memory_space<vmem>>, vector<16x1xf32>
      %cst_18 = arith.constant 0.000000e+00 : f32
      %45 = vector.broadcast %cst_18 : f32 to vector<16x1xf32>
      %46 = arith.select %43, %25, %45 : vector<16x1xi1>, vector<16x1xf32>
      %47 = arith.addf %44, %46 : vector<16x1xf32>
      %c0_19 = arith.constant 0 : index
      %c0_20 = arith.constant 0 : index
      %48 = vector.load %arg5[%c0_19, %c0_20] : memref<16x1xf32, #tpu.memory_space<vmem>>, vector<16x1xf32>
      tpu.vector_store %arg5[%c0_19, %c0_20], %47 {strides = array<i32>} : memref<16x1xf32, #tpu.memory_space<vmem>>, vector<16x1xf32>,
    } else {
    }
    %c0_i32_13 = arith.constant 0 : i32
    %36 = arith.cmpi eq, %arg1, %c0_i32_13 : i32
    %37 = arith.extui %36 : i1 to i32
    %c0_i32_14 = arith.constant 0 : i32
    %38 = arith.cmpi ne, %37, %c0_i32_14 : i32
    scf.if %38 {
      %c0_15 = arith.constant 0 : index
      %c0_16 = arith.constant 0 : index
      %39 = vector.load %arg5[%c0_15, %c0_16] : memref<16x1xf32, #tpu.memory_space<vmem>>, vector<16x1xf32>
      %40 = vector.shape_cast %39 : vector<16x1xf32> to vector<1x16x1xf32>
      %cst_17 = arith.constant dense<0.000000e+00> : vector<1xf32>
      %41 = vector.multi_reduction <add>, %40, %cst_17 [1, 2] : vector<1x16x1xf32> to vector<1xf32>
      %42 = vector.shape_cast %41 : vector<1xf32> to vector<1x1x1xf32>
      %43 = vector.extract %42[0, 0, 0] : f32 from vector<1x1x1xf32>
      %44 = vector.broadcast %43 : f32 to vector<1x1x1xf32>
      %c0_18 = arith.constant 0 : index
      %c0_19 = arith.constant 0 : index
      %c0_20 = arith.constant 0 : index
      %45 = vector.load %arg4[%c0_18, %c0_19, %c0_20] : memref<1x1x1xf32, #tpu.memory_space<vmem>>, vector<1x1x1xf32>
      tpu.vector_store %arg4[%c0_18, %c0_19, %c0_20], %44 {strides = array<i32>} : memref<1x1x1xf32, #tpu.memory_space<vmem>>, vector<1x1x1xf32>,
    } else {
    }
    return
  }
  func.func @transform_0(%arg0: i32, %arg1: i32) -> (i32, i32) {
    %c1_i32 = arith.constant 1 : i32
    %0 = arith.muli %arg0, %c1_i32 : i32
    %1 = arith.addi %0, %arg1 : i32
    %c0_i32 = arith.constant 0 : i32
    %2 = arith.minsi %1, %c0_i32 : i32
    %c0_i32_0 = arith.constant 0 : i32
    %c0_i32_1 = arith.constant 0 : i32
    return %2, %c0_i32_0 : i32, i32
  }
  func.func @transform_1(%arg0: i32, %arg1: i32) -> (i32, i32) {
    %c1_i32 = arith.constant 1 : i32
    %0 = arith.muli %arg0, %c1_i32 : i32
    %1 = arith.addi %0, %arg1 : i32
    %c0_i32 = arith.constant 0 : i32
    %2 = arith.minsi %1, %c0_i32 : i32
    %c0_i32_0 = arith.constant 0 : i32
    %c0_i32_1 = arith.constant 0 : i32
    return %2, %c0_i32_0 : i32, i32
  }
  func.func @transform_2(%arg0: i32, %arg1: i32) -> (i32, i32, i32) {
    %c0_i32 = arith.constant 0 : i32
    %c0_i32_0 = arith.constant 0 : i32
    %c0_i32_1 = arith.constant 0 : i32
    return %arg0, %c0_i32, %c0_i32_0 : i32, i32, i32
  }
}

</mosaic_0001>

<llo_original>
// kernel: tpu_custom_call.1
$region0: #{tpu_custom_call.1}
  #allocation0 [shape = 'u32[]', space=smem, size = 0x4, offset = 0x4, fixed_abs, tag = 'smem constant byte address 0x4 - core index']
  #allocation1 [shape = 'u32[144,128]{1,0:T(1,128)}', space=vmem, size = 0x12000, scoped, tag = 'internal scratch']
  #allocation2 [shape = 'f32[16,1]{1,0:T(8,128)}', space=vmem, size = 0x2000, scoped, tag = 'scratch operand']
  %s0 = inlined_call_operand.vmem [shape: f32[16,1], index: 0, kind: input, shape index: {}]
  %s1 = inlined_call_operand.vmem [shape: f32[16,128], index: 1, kind: input, shape index: {}]
  %s2 = inlined_call_operand.hbm [shape: f32[1,1,1], index: 2, kind: output, shape index: {}]
  %s3 = sld [smem:[#allocation0]]
  $region34: #{tpu_custom_call.1} parent=0
    _
  %s5 = ssub.s32 1, %s3
  %s6 = scalar_select 0, %s5, %s3
  $region1: #{tpu_custom_call.1} parent=0
    #allocation3 [shape = 'u8[512]{0}', space=vmem, size = 0x400, scoped, tag = 'output window, operand 0, single buffered']
    #allocation4 [shape = 's32[1]{0}', space=sflag, size = 0x4, scoped, tag = 'scoped memory for tpu_custom_call.1']
    %7 = vsyncpa [#allocation4], 0
    // Predicated region
    $region2: #{tpu_custom_call.1} parent=1 // pred_check
      _
    $region3: #{tpu_custom_call.1} parent=1 // pred_check_branch
      %9 = sbr.rel (0) target = $region5
    $region4: #{tpu_custom_call.1} parent=1 // pred_region
      %s10 = sadd.s32 0, 0
      %p11 = scmp.lt.s32.totalorder %s10, 0
      %s12 = scalar_select %p11, %s10, 0
      %s13 = smul.u32 2, %s12
      %p14 = scmp.lt.s32.totalorder %s13, 1
      %s15 = scalar_select %p14, %s13, 1
      %s16 = smul.addr %s15, 8
      %s17 = scalar_lea.vmem %s0, %s16
      %s18 = sadd.s32 0, 0
      %p19 = scmp.lt.s32.totalorder %s18, 0
      %s20 = scalar_select %p19, %s18, 0
      %s21 = smul.u32 2, %s20
    $region5: #{tpu_custom_call.1} parent=1 // pred_fallthru
      _
    // Predicated region
    $region6: #{tpu_custom_call.1} parent=1 // pred_check
      _
    $region7: #{tpu_custom_call.1} parent=1 // pred_check_branch
      %23 = sbr.rel (0) target = $region9
    $region8: #{tpu_custom_call.1} parent=1 // pred_region
      %s24 = sadd.s32 0, 0
      %p25 = scmp.lt.s32.totalorder %s24, 0
      %s26 = scalar_select %p25, %s24, 0
      %s27 = smul.u32 2, %s26
      %p28 = scmp.lt.s32.totalorder %s27, 1
      %s29 = scalar_select %p28, %s27, 1
      %s30 = smul.addr %s29, 8
      %s31 = scalar_lea.vmem %s1, %s30
      %s32 = sadd.s32 0, 0
      %p33 = scmp.lt.s32.totalorder %s32, 0
      %s34 = scalar_select %p33, %s32, 0
      %s35 = smul.u32 2, %s34
    $region9: #{tpu_custom_call.1} parent=1 // pred_fallthru
      _
    %s36 = sadd.s32 0, 0
    %p37 = scmp.lt.s32.totalorder %s36, 0
    %s38 = scalar_select %p37, %s36, 0
    %s39 = smul.u32 2, %s38
    %p40 = scmp.lt.s32.totalorder %s39, 1
    %s41 = scalar_select %p40, %s39, 1
    %s42 = smul.addr %s41, 8
    %s43 = scalar_lea.vmem %s0, %s42
    %s44 = sadd.s32 0, 0
    %p45 = scmp.lt.s32.totalorder %s44, 0
    %s46 = scalar_select %p45, %s44, 0
    %s47 = smul.u32 2, %s46
    %p48 = scmp.lt.s32.totalorder %s47, 1
    %s49 = scalar_select %p48, %s47, 1
    %s50 = smul.addr %s49, 8
    %s51 = scalar_lea.vmem %s1, %s50
    %s52 = sadd.s32 0, 0
    %p53 = scmp.lt.s32.totalorder %s52, 0
    %s54 = scalar_select %p53, %s52, 0
    %s55 = smul.u32 2, %s54
    %p56 = scmp.lt.s32.totalorder %s55, 1
    %s57 = scalar_select %p56, %s55, 1
    %s58 = smul.addr %s57, 8
    %s59 = scalar_lea.vmem %s0, %s58
    %s60 = sadd.s32 0, 0
    %p61 = scmp.lt.s32.totalorder %s60, 0
    %s62 = scalar_select %p61, %s60, 0
    %s63 = smul.u32 2, %s62
    %s64 = sadd.s32 0, 0
    %p65 = scmp.lt.s32.totalorder %s64, 0
    %s66 = scalar_select %p65, %s64, 0
    %s67 = smul.u32 2, %s66
    %p68 = scmp.lt.s32.totalorder %s67, 1
    %s69 = scalar_select %p68, %s67, 1
    %s70 = smul.addr %s69, 8
    %s71 = scalar_lea.vmem %s1, %s70
    %s72 = sadd.s32 0, 0
    %p73 = scmp.lt.s32.totalorder %s72, 0
    %s74 = scalar_select %p73, %s72, 0
    %s75 = smul.u32 2, %s74
    %p76 = scmp.eq.s32.totalorder 0, 0
    // Predicated region
    $region10: #{tpu_custom_call.1} parent=1 // pred_check
      %p77 = pneg %p76
    $region11: #{tpu_custom_call.1} parent=1 // pred_check_branch
      %79 = sbr.rel (%p77) target = $region13
    $region12: #{tpu_custom_call.1} parent=1 // pred_region
      %vm80 = vcmask 7168
      %81 = vst.msk [vmem:[#allocation2] sm:$0xff] %vm80, 0.0
      %82 = vst.msk [vmem:[#allocation2 + $0x8] sm:$0xff] %vm80, 0.0
    $region13: #{tpu_custom_call.1} parent=1 // pred_fallthru
      _
    %v83 = vld [vmem:[%s71] sm:$0xff]
    %v84 = vld [vmem:[%s71 + $0x8] sm:$0xff]
    %v85 = vld [vmem:[%s59] sm:$0xff]
    %v86 = vld [vmem:[%s59 + $0x8] sm:$0xff]
    %87 = vmax.xlane.f32.xlu0 %v83
    %v88 = vpop.xlane.xlu0 %87
    %89 = vmax.xlane.f32.xlu0 %v84
    %v90 = vpop.xlane.xlu0 %89
    %v91 = vsub.f32 %v83, %v88
    %v92 = vsub.f32 %v84, %v90
    %v93 = vmul.f32 %v91, 1.442695
    %v94 = vpow.pop %v93
    %v95 = vmul.f32 %v92, 1.442695
    %v96 = vpow.pop %v95
    %v97 = vmul.f32 %v83, %v94
    %v98 = vmul.f32 %v84, %v96
    %99 = vadd.xlane.f32.xlu0 %v97
    %v100 = vpop.xlane.xlu0 %99
    %101 = vadd.xlane.f32.xlu0 %v98
    %v102 = vpop.xlane.xlu0 %101
    %103 = vadd.xlane.f32.xlu0 %v94
    %v104 = vpop.xlane.xlu0 %103
    %105 = vadd.xlane.f32.xlu0 %v96
    %v106 = vpop.xlane.xlu0 %105
    %v107 = vrcp.pop %v104
    %v108 = vrcp.pop %v106
    %v109 = vmul.f32 %v104, %v107
    %v110 = vmul.f32 %v106, %v108
    %v111 = vsub.f32 2.0, %v109
    %v112 = vsub.f32 2.0, %v110
    %v113 = vmul.f32 %v107, %v111
    %v114 = vmul.f32 %v108, %v112
    %v115 = vsub.f32 12.0, %v85
    %v116 = vsub.f32 12.0, %v86
    %v117 = vmul.f32 %v100, %v113
    %v118 = vmul.f32 %v102, %v114
    %v119 = vadd.f32 %v115, %v117
    %v120 = vadd.f32 %v116, %v118
    %v121 = vmax.f32 %v119, 0.0
    %v122 = vmax.f32 %v120, 0.0
    %s123 = sadd.s32 0, 0
    %s124 = smul.u32 %s123, 16
    %s125 = sadd.s32 %s124, 16
    %p126 = scmp.le.s32.totalorder %s125, 16
    // Predicated region
    $region14: #{tpu_custom_call.1} parent=1 // pred_check
      %p127 = pneg %p126
    $region15: #{tpu_custom_call.1} parent=1 // pred_check_branch
      %129 = sbr.rel (%p127) target = $region17
    $region16: #{tpu_custom_call.1} parent=1 // pred_region
      %v130 = vld [vmem:[#allocation2] sm:$0xff]
      %v131 = vld [vmem:[#allocation2 + $0x8] sm:$0xff]
      %v132 = vadd.f32 %v130, %v121
      %v133 = vadd.f32 %v131, %v122
      %vm134 = vcmask 7168
      %135 = vst.msk [vmem:[#allocation2] sm:$0xff] %vm134, %v132
      %136 = vst.msk [vmem:[#allocation2 + $0x8] sm:$0xff] %vm134, %v133
    $region17: #{tpu_custom_call.1} parent=1 // pred_fallthru
      _
    %p137 = scmp.gt.s32.totalorder %s125, 16
    // Predicated region
    $region18: #{tpu_custom_call.1} parent=1 // pred_check
      %p138 = pneg %p137
    $region19: #{tpu_custom_call.1} parent=1 // pred_check_branch
      %140 = sbr.rel (%p138) target = $region21
    $region20: #{tpu_custom_call.1} parent=1 // pred_region
      %v141 = vlaneseq
      %v142 = vshrl.u32 %v141, 7
      %v143 = vadd.s32 %v142, 8
      %v144 = vstv %s124
      %v145 = vadd.s32 %v144, %v142
      %v146 = vadd.s32 %v144, %v143
      %vm147 = vcmp.lt.s32.totalorder %v145, 16
      %vm148 = vcmp.lt.s32.totalorder %v146, 16
      %v149 = vld [vmem:[#allocation2] sm:$0xff]
      %v150 = vld [vmem:[#allocation2 + $0x8] sm:$0xff]
      %v151 = vsel %vm147, %v121, 0.0
      %v152 = vsel %vm148, %v122, 0.0
      %v153 = vadd.f32 %v149, %v151
      %v154 = vadd.f32 %v150, %v152
      %vm155 = vcmask 7168
      %156 = vst.msk [vmem:[#allocation2] sm:$0xff] %vm155, %v153
      %157 = vst.msk [vmem:[#allocation2 + $0x8] sm:$0xff] %vm155, %v154
    $region21: #{tpu_custom_call.1} parent=1 // pred_fallthru
      _
    // Predicated region
    $region22: #{tpu_custom_call.1} parent=1 // pred_check
      %p158 = pneg %p76
    $region23: #{tpu_custom_call.1} parent=1 // pred_check_branch
      %160 = sbr.rel (%p158) target = $region25
    $region24: #{tpu_custom_call.1} parent=1 // pred_region
      %v161 = vld [vmem:[#allocation2] sm:$0xff]
      %v162 = vld [vmem:[#allocation2 + $0x8] sm:$0xff]
      %vm163 = vcmask 7168
      %v164 = vsel %vm163, %v161, 0.0
      %v165 = vsel %vm163, %v162, 0.0
      %v166 = vadd.f32 %v164, %v165
      %167 = vadd.xlane.f32.xlu0 %v166
      %v168 = vpop.xlane.xlu0 %167
      %v169 = vrot.slane %v168, 4
      %v170 = vadd.f32 %v168, %v169
      %v171 = vrot.slane %v170, 2
      %v172 = vadd.f32 %v170, %v171
      %v173 = vrot.slane %v172, 1
      %v174 = vadd.f32 %v172, %v173
      %s175 = vtos %v174
      %v176 = vstv %s175
      %vm177 = vcmask 0
      %178 = vst.msk [vmem:[#allocation3] sm:$0x1] %vm177, %v176
    $region25: #{tpu_custom_call.1} parent=1 // pred_fallthru
      _
    // Predicated region
    $region26: #{tpu_custom_call.1} parent=1 // pred_check
      _
    $region27: #{tpu_custom_call.1} parent=1 // pred_check_branch
      %180 = sbr.rel (0) target = $region29
    $region28: #{tpu_custom_call.1} parent=1 // pred_region
      %s182 = ssub.s32 16, 16
      %183 = vsyncadd [#allocation4], %s182
      %s185 = sshll.u32 [#allocation3], 4
      %s186 = int_to_ptr.vmem [resolvable:$true] %s185
      %188 = dma.vmem_to_hbm [thread:$0]  %s186, 16, %s2, [#allocation4]
    $region29: #{tpu_custom_call.1} parent=1 // pred_fallthru
      _
    // Predicated region
    $region30: #{tpu_custom_call.1} parent=1 // pred_check
      _
    $region31: #{tpu_custom_call.1} parent=1 // pred_check_branch
      %190 = sbr.rel (0) target = $region33
    $region32: #{tpu_custom_call.1} parent=1 // pred_region
      %191 = dma.done [#allocation4], 16
    $region33: #{tpu_custom_call.1} parent=1 // pred_fallthru
      _
    %192 = vsyncpa [#allocation4], 1

</llo_original>
